<compile_context>
chip_gen: v5e
topology: v5e:2x2
jax: 0.10.0
libtpu: 0.0.40
codegen_flags: <defaults>
</compile_context>

<pallas_src>
import jax
import jax.numpy as jnp
from jax.experimental import pallas as pl
from jax.experimental.pallas import tpu as pltpu

LANE = 128
SUBLANE = 8
VMEM_LIMIT = 48 << 20  # leave headroom on v7x's 64 MiB physical VMEM


def _round_up(x, m):
    return (x + m - 1) // m * m


# ---------------------------------------------------------------------------
# Affine kernel: h = x @ W + b   (row tiled; bias fused into the single pass)
# ---------------------------------------------------------------------------
def affine_kernel(x_ref, w_ref, b_ref, h_ref):
    h_ref[...] = (
        jnp.dot(x_ref[...], w_ref[...], preferred_element_type=jnp.float32)
        + b_ref[...]
    ).astype(h_ref.dtype)


def affine(x, w, b2d, *, tm):
    Np, Hp = x.shape
    return pl.pallas_call(
        affine_kernel,
        out_shape=jax.ShapeDtypeStruct((Np, Hp), x.dtype),
        grid_spec=pltpu.PrefetchScalarGridSpec(
            num_scalar_prefetch=0,
            grid=(Np // tm,),
            in_specs=[
                pl.BlockSpec((tm, Hp), lambda i: (i, 0)),   # x rows
                pl.BlockSpec((Hp, Hp), lambda i: (0, 0)),   # W (resident)
                pl.BlockSpec((1, Hp), lambda i: (0, 0)),    # b (resident)
            ],
            out_specs=pl.BlockSpec((tm, Hp), lambda i: (i, 0)),
        ),
        compiler_params=pltpu.CompilerParams(
            dimension_semantics=("parallel",),
            vmem_limit_bytes=VMEM_LIMIT,
        ),
        cost_estimate=pl.CostEstimate(
            flops=2 * Np * Hp * Hp,
            transcendentals=0,
            bytes_accessed=(2 * Np * Hp + Hp * Hp + Hp) * x.dtype.itemsize,
        ),
    )(x, w, b2d)


# ---------------------------------------------------------------------------
# Hypergraph propagation: out = G @ h        (row x K tiled, K-accumulated)
#          residual form : out = 0.5 * (G @ h + res)   (fused epilogue)
# ---------------------------------------------------------------------------
def prop_kernel(g_ref, h_ref, out_ref, acc_ref):
    @pl.when(pl.program_id(1) == 0)
    def _init():
        acc_ref[...] = jnp.zeros_like(acc_ref)

    acc_ref[...] += jnp.dot(
        g_ref[...], h_ref[...], preferred_element_type=jnp.float32
    )

    @pl.when(pl.program_id(1) == pl.num_programs(1) - 1)
    def _finalize():
        out_ref[...] = acc_ref[...].astype(out_ref.dtype)


def prop_residual_kernel(g_ref, h_ref, res_ref, out_ref, acc_ref):
    @pl.when(pl.program_id(1) == 0)
    def _init():
        acc_ref[...] = jnp.zeros_like(acc_ref)

    acc_ref[...] += jnp.dot(
        g_ref[...], h_ref[...], preferred_element_type=jnp.float32
    )

    @pl.when(pl.program_id(1) == pl.num_programs(1) - 1)
    def _finalize():
        # fused epilogue: (x1 + G @ h2) * 0.5
        out_ref[...] = (
            (acc_ref[...] + res_ref[...].astype(jnp.float32)) * 0.5
        ).astype(out_ref.dtype)


def propagate(g, h, res=None, *, tm, tk):
    Np = g.shape[0]
    Hp = h.shape[1]

    in_specs = [
        pl.BlockSpec((tm, tk), lambda i, k: (i, k)),   # G streamed tile
        pl.BlockSpec((tk, Hp), lambda i, k: (k, 0)),   # h K-slice
    ]
    operands = [g, h]
    if res is not None:
        in_specs.append(pl.BlockSpec((tm, Hp), lambda i, k: (i, 0)))
        operands.append(res)
        kernel = prop_residual_kernel
    else:
        kernel = prop_kernel

    return pl.pallas_call(
        kernel,
        out_shape=jax.ShapeDtypeStruct((Np, Hp), h.dtype),
        grid_spec=pltpu.PrefetchScalarGridSpec(
            num_scalar_prefetch=0,
            grid=(Np // tm, Np // tk),
            in_specs=in_specs,
            out_specs=pl.BlockSpec((tm, Hp), lambda i, k: (i, 0)),
            scratch_shapes=[pltpu.VMEM((tm, Hp), jnp.float32)],
        ),
        compiler_params=pltpu.CompilerParams(
            dimension_semantics=("parallel", "arbitrary"),
            vmem_limit_bytes=VMEM_LIMIT,
        ),
        cost_estimate=pl.CostEstimate(
            flops=2 * Np * Np * Hp,
            transcendentals=0,
            bytes_accessed=(Np * Np + 3 * Np * Hp) * g.dtype.itemsize,
        ),
    )(*operands)


# ---------------------------------------------------------------------------
# Full forward
# ---------------------------------------------------------------------------
def hgnn_forward(x, G, w1, b1, w2, b2):
    N, H = x.shape
    assert G.shape == (N, N)
    dt = x.dtype

    # Pad hidden dim to a lane-dense multiple of 128 (H=32 would leave most of
    # the MXU result columns and the store path idle).
    Hp = _round_up(max(H, LANE), LANE)

    # Pick tiles; pad N so every block is full (no partial blocks).
    if N <= 512:
        Np = _round_up(N, SUBLANE)
        tm = tk = Np                      # single full block per axis
    else:
        tm, tk = 256, 512                 # 256x512 f32 G tile = 0.5 MiB
        Np = _round_up(N, 512)

    # Zero padding keeps the math exact: padded G rows/cols contribute nothing
    # and padded hidden columns stay zero through both layers.
    x_p = jnp.zeros((Np, Hp), dt).at[:N, :H].set(x)
    g_p = jnp.zeros((Np, Np), dt).at[:N, :N].set(G)
    w1_p = jnp.zeros((Hp, Hp), dt).at[:H, :H].set(w1)
    w2_p = jnp.zeros((Hp, Hp), dt).at[:H, :H].set(w2)
    b1_p = jnp.zeros((1, Hp), dt).at[0, :H].set(b1)
    b2_p = jnp.zeros((1, Hp), dt).at[0, :H].set(b2)

    # Layer 1: x1 = G @ (x @ W1 + b1)
    h1 = affine(x_p, w1_p, b1_p, tm=tm)
    x1 = propagate(g_p, h1, tm=tm, tk=tk)

    # Layer 2 fused with the average: out = 0.5 * (x1 + G @ (x1 @ W2 + b2))
    h2 = affine(x1, w2_p, b2_p, tm=tm)
    out = propagate(g_p, h2, res=x1, tm=tm, tk=tk)

    return out[:N, :H]


def reference_forward(x, G, w1, b1, w2, b2):
    x1 = G @ (x @ w1 + b1)
    x2 = G @ (x1 @ w2 + b2)
    return (x1 + x2) / 2.0


if __name__ == "__main__":
    key = jax.random.PRNGKey(0)
    k_x, k_g, k_w1, k_b1, k_w2, k_b2 = jax.random.split(key, 6)

    N = 64       # number of nodes
    n_hid = 32   # hidden dim

    x = jax.random.normal(k_x, (N, n_hid), dtype=jnp.float32)
    G = jax.random.normal(k_g, (N, N), dtype=jnp.float32)

    # HGNN_conv params: normal(std=0.02), as in nn.init.normal_(..., std=0.02)
    w1 = 0.02 * jax.random.normal(k_w1, (n_hid, n_hid), dtype=jnp.float32)
    b1 = 0.02 * jax.random.normal(k_b1, (n_hid,), dtype=jnp.float32)
    w2 = 0.02 * jax.random.normal(k_w2, (n_hid, n_hid), dtype=jnp.float32)
    b2 = 0.02 * jax.random.normal(k_b2, (n_hid,), dtype=jnp.float32)

    out = hgnn_forward(x, G, w1, b1, w2, b2)
    out = jax.block_until_ready(out)

    ref = reference_forward(x, G, w1, b1, w2, b2)
    assert out.shape == (N, n_hid)
    assert jnp.allclose(out, ref, atol=1e-4, rtol=1e-4), "mismatch vs reference"

    print("KERNEL_OK")
</pallas_src>

<mosaic_0001>
module attributes {stable_mosaic.version = 11 : i64} {
  func.func @affine_kernel(%arg0: i32, %arg1: memref<64x128xf32, #tpu.memory_space<vmem>>, %arg2: memref<128x128xf32, #tpu.memory_space<vmem>>, %arg3: memref<1x128xf32, #tpu.memory_space<vmem>>, %arg4: memref<64x128xf32, #tpu.memory_space<vmem>>) attributes {dimension_semantics = [#tpu.dimension_semantics<parallel>], iteration_bounds = array<i64: 1>, scalar_prefetch = 0 : i64, scratch_operands = 0 : i64, tpu.core_type = #tpu.core_type<tc>, window_params = [{transform_indices = @transform_0, window_bounds = array<i64: 64, 128>}, {pipeline_mode = #tpu.pipeline_mode<synchronous>, transform_indices = @transform_1, window_bounds = array<i64: 128, 128>}, {pipeline_mode = #tpu.pipeline_mode<synchronous>, transform_indices = @transform_2, window_bounds = array<i64: 1, 128>}, {transform_indices = @transform_3, window_bounds = array<i64: 64, 128>}]} {
    %c0 = arith.constant 0 : index
    %c0_0 = arith.constant 0 : index
    %0 = vector.load %arg1[%c0, %c0_0] : memref<64x128xf32, #tpu.memory_space<vmem>>, vector<64x128xf32>
    %c0_1 = arith.constant 0 : index
    %c0_2 = arith.constant 0 : index
    %1 = vector.load %arg2[%c0_1, %c0_2] : memref<128x128xf32, #tpu.memory_space<vmem>>, vector<128x128xf32>
    %cst = arith.constant dense<0.000000e+00> : vector<64x128xf32>
    %2 = tpu.matmul %0, %1, %cst {dimension_numbers = #tpu.dot_dimension_numbers<[1], [0], [0], [1], [0, 0, 1, 1], [], []>} : vector<64x128xf32>, vector<128x128xf32>, vector<64x128xf32> -> vector<64x128xf32>
    %c0_3 = arith.constant 0 : index
    %c0_4 = arith.constant 0 : index
    %3 = vector.load %arg3[%c0_3, %c0_4] : memref<1x128xf32, #tpu.memory_space<vmem>>, vector<1x128xf32>
    %4 = vector.broadcast %3 : vector<1x128xf32> to vector<64x128xf32>
    %5 = arith.addf %2, %4 : vector<64x128xf32>
    %c0_5 = arith.constant 0 : index
    %c0_6 = arith.constant 0 : index
    %6 = vector.load %arg4[%c0_5, %c0_6] : memref<64x128xf32, #tpu.memory_space<vmem>>, vector<64x128xf32>
    tpu.vector_store %arg4[%c0_5, %c0_6], %5 {strides = array<i32>} : memref<64x128xf32, #tpu.memory_space<vmem>>, vector<64x128xf32>,
    return
  }
  func.func @transform_0(%arg0: i32) -> (i32, i32) {
    %c0_i32 = arith.constant 0 : i32
    %c0_i32_0 = arith.constant 0 : i32
    return %arg0, %c0_i32 : i32, i32
  }
  func.func @transform_1(%arg0: i32) -> (i32, i32) {
    %c0_i32 = arith.constant 0 : i32
    %c0_i32_0 = arith.constant 0 : i32
    %c0_i32_1 = arith.constant 0 : i32
    return %c0_i32, %c0_i32_0 : i32, i32
  }
  func.func @transform_2(%arg0: i32) -> (i32, i32) {
    %c0_i32 = arith.constant 0 : i32
    %c0_i32_0 = arith.constant 0 : i32
    %c0_i32_1 = arith.constant 0 : i32
    return %c0_i32, %c0_i32_0 : i32, i32
  }
  func.func @transform_3(%arg0: i32) -> (i32, i32) {
    %c0_i32 = arith.constant 0 : i32
    %c0_i32_0 = arith.constant 0 : i32
    return %arg0, %c0_i32 : i32, i32
  }
}

</mosaic_0001>

<llo_original>
// kernel: tpu_custom_call.1
$region0: #{tpu_custom_call.1}
  #allocation0 [shape = 'u32[]', space=smem, size = 0x4, offset = 0x4, fixed_abs, tag = 'smem constant byte address 0x4 - core index']
  #allocation1 [shape = 'u32[72,128]{1,0:T(1,128)}', space=vmem, size = 0x9000, scoped, tag = 'internal scratch']
  %s0 = inlined_call_operand.hbm [shape: f32[64,128], index: 0, kind: input, shape index: {}]
  %s1 = inlined_call_operand.hbm [shape: f32[128,128], index: 1, kind: input, shape index: {}]
  %s2 = inlined_call_operand.vmem [shape: f32[1,128], index: 2, kind: input, shape index: {}]
  %s3 = inlined_call_operand.hbm [shape: f32[64,128], index: 3, kind: output, shape index: {}]
  %s4 = sld [smem:[#allocation0]]
  $region30: #{tpu_custom_call.1} parent=0
    _
  %s6 = ssub.s32 1, %s4
  %s7 = scalar_select 0, %s6, %s4
  $region1: #{tpu_custom_call.1} parent=0
    #allocation2 [shape = 'u8[32768]{0}', space=vmem, size = 0x8000, scoped, tag = 'input window, operand 0, single buffered']
    #allocation3 [shape = 's32[1]{0}', space=sflag, size = 0x4, scoped, tag = 'scoped memory for tpu_custom_call.1']
    #allocation4 [shape = 's32[1]{0}', space=sflag, size = 0x4, scoped, tag = 'scoped memory for tpu_custom_call.1']
    #allocation5 [shape = 'u8[65536]{0}', space=vmem, size = 0x10000, scoped, tag = 'input window, operand 1, single buffered']
    #allocation6 [shape = 's32[1]{0}', space=sflag, size = 0x4, scoped, tag = 'scoped memory for tpu_custom_call.1']
    #allocation7 [shape = 'u8[32768]{0}', space=vmem, size = 0x8000, scoped, tag = 'output window, operand 0, single buffered']
    %8 = vsyncpa [#allocation3], 0
    %9 = vsyncpa [#allocation6], 0
    %10 = vsyncpa [#allocation4], 0
    // Predicated region
    $region2: #{tpu_custom_call.1} parent=1 // pred_check
      _
    $region3: #{tpu_custom_call.1} parent=1 // pred_check_branch
      %12 = sbr.rel (0) target = $region5
    $region4: #{tpu_custom_call.1} parent=1 // pred_region
      %14 = vsyncadd [#allocation3], 0
      %s15 = sshll.u32 %s0, 4
      %s16 = int_to_ptr.hbm [resolvable:$true] %s15
      %s17 = sshll.u32 [#allocation2], 4
      %s18 = int_to_ptr.vmem [resolvable:$true] %s17
      %23 = dma.hbm_to_vmem [thread:$0]  %s16, 1024, %s18, [#allocation3], 128, 128, 8
    $region5: #{tpu_custom_call.1} parent=1 // pred_fallthru
      _
    // Predicated region
    $region6: #{tpu_custom_call.1} parent=1 // pred_check
      _
    $region7: #{tpu_custom_call.1} parent=1 // pred_check_branch
      %25 = sbr.rel (0) target = $region9
    $region8: #{tpu_custom_call.1} parent=1 // pred_region
      %27 = vsyncadd [#allocation6], 0
      %s28 = sshll.u32 %s1, 4
      %s29 = int_to_ptr.hbm [resolvable:$true] %s28
      %s30 = sshll.u32 [#allocation5], 4
      %s31 = int_to_ptr.vmem [resolvable:$true] %s30
      %36 = dma.hbm_to_vmem [thread:$0]  %s29, 2048, %s31, [#allocation6], 128, 128, 8
    $region9: #{tpu_custom_call.1} parent=1 // pred_fallthru
      _
    // Predicated region
    $region10: #{tpu_custom_call.1} parent=1 // pred_check
      _
    $region11: #{tpu_custom_call.1} parent=1 // pred_check_branch
      %38 = sbr.rel (0) target = $region13
    $region12: #{tpu_custom_call.1} parent=1 // pred_region
      _
    $region13: #{tpu_custom_call.1} parent=1 // pred_fallthru
      _
    // Predicated region
    $region14: #{tpu_custom_call.1} parent=1 // pred_check
      _
    $region15: #{tpu_custom_call.1} parent=1 // pred_check_branch
      %40 = sbr.rel (0) target = $region17
    $region16: #{tpu_custom_call.1} parent=1 // pred_region
      %42 = dma.done [#allocation3], 1024
    $region17: #{tpu_custom_call.1} parent=1 // pred_fallthru
      _
    // Predicated region
    $region18: #{tpu_custom_call.1} parent=1 // pred_check
      _
    $region19: #{tpu_custom_call.1} parent=1 // pred_check_branch
      %44 = sbr.rel (0) target = $region21
    $region20: #{tpu_custom_call.1} parent=1 // pred_region
      %46 = dma.done [#allocation6], 2048
    $region21: #{tpu_custom_call.1} parent=1 // pred_fallthru
      _
    %v47 = vld [vmem:[#allocation2] sm:$0xff]
    %v48 = vld [vmem:[#allocation2 + $0x8] sm:$0xff]
    %v49 = vld [vmem:[#allocation2 + $0x10] sm:$0xff]
    %v50 = vld [vmem:[#allocation2 + $0x18] sm:$0xff]
    %v51 = vld [vmem:[#allocation2 + $0x20] sm:$0xff]
    %v52 = vld [vmem:[#allocation2 + $0x28] sm:$0xff]
    %v53 = vld [vmem:[#allocation2 + $0x30] sm:$0xff]
    %v54 = vld [vmem:[#allocation2 + $0x38] sm:$0xff]
    %v55 = vld [vmem:[#allocation5] sm:$0xff]
    %v56 = vld [vmem:[#allocation5 + $0x8] sm:$0xff]
    %v57 = vld [vmem:[#allocation5 + $0x10] sm:$0xff]
    %v58 = vld [vmem:[#allocation5 + $0x18] sm:$0xff]
    %v59 = vld [vmem:[#allocation5 + $0x20] sm:$0xff]
    %v60 = vld [vmem:[#allocation5 + $0x28] sm:$0xff]
    %v61 = vld [vmem:[#allocation5 + $0x30] sm:$0xff]
    %v62 = vld [vmem:[#allocation5 + $0x38] sm:$0xff]
    %v63 = vld [vmem:[#allocation5 + $0x40] sm:$0xff]
    %v64 = vld [vmem:[#allocation5 + $0x48] sm:$0xff]
    %v65 = vld [vmem:[#allocation5 + $0x50] sm:$0xff]
    %v66 = vld [vmem:[#allocation5 + $0x58] sm:$0xff]
    %v67 = vld [vmem:[#allocation5 + $0x60] sm:$0xff]
    %v68 = vld [vmem:[#allocation5 + $0x68] sm:$0xff]
    %v69 = vld [vmem:[#allocation5 + $0x70] sm:$0xff]
    %v70 = vld [vmem:[#allocation5 + $0x78] sm:$0xff]
    %v71 = vld [vmem:[%s2] sm:$0x1]
    %v73 = vperm.slane %v71, 0
    %75 = vmatpush.msra.mxu0 %v70
    %76 = vmatpush.msra.mxu0 %v69
    %77 = vmatpush.msra.mxu0 %v68
    %78 = vmatpush.msra.mxu0 %v67
    %79 = vmatpush.msra.mxu0 %v66
    %80 = vmatpush.msra.mxu0 %v65
    %81 = vmatpush.msra.mxu0 %v64
    %82 = vmatpush.msra.mxu0 %v63
    %83 = vmatpush.msra.mxu0 %v62
    %84 = vmatpush.msra.mxu0 %v61
    %85 = vmatpush.msra.mxu0 %v60
    %86 = vmatpush.msra.mxu0 %v59
    %87 = vmatpush.msra.mxu0 %v58
    %88 = vmatpush.msra.mxu0 %v57
    %89 = vmatpush.msra.mxu0 %v56
    %90 = vmatpush.msra.mxu0 %v55
    %91 = vmatmul.f32.gmra.mxu0 %v47
    %v92 = vpop.f32.mrf.mxu0
    %v93 = vadd.f32 %v73, %v92
    %94 = vmatmul.f32.gmra.mxu0 %v48
    %v95 = vpop.f32.mrf.mxu0
    %v96 = vadd.f32 %v73, %v95
    %97 = vmatmul.f32.gmra.mxu0 %v49
    %v98 = vpop.f32.mrf.mxu0
    %v99 = vadd.f32 %v73, %v98
    %100 = vmatmul.f32.gmra.mxu0 %v50
    %v101 = vpop.f32.mrf.mxu0
    %v102 = vadd.f32 %v73, %v101
    %103 = vmatmul.f32.gmra.mxu0 %v51
    %v104 = vpop.f32.mrf.mxu0
    %v105 = vadd.f32 %v73, %v104
    %106 = vmatmul.f32.gmra.mxu0 %v52
    %v107 = vpop.f32.mrf.mxu0
    %v108 = vadd.f32 %v73, %v107
    %109 = vmatmul.f32.gmra.mxu0 %v53
    %v110 = vpop.f32.mrf.mxu0
    %v111 = vadd.f32 %v73, %v110
    %112 = vmatmul.f32.gmra.mxu0 %v54
    %v113 = vpop.f32.mrf.mxu0
    %v114 = vadd.f32 %v73, %v113
    %115 = vdwg.mxu0
    %116 = vst [vmem:[#allocation7] sm:$0xff] %v93
    %117 = vst [vmem:[#allocation7 + $0x8] sm:$0xff] %v96
    %118 = vst [vmem:[#allocation7 + $0x10] sm:$0xff] %v99
    %119 = vst [vmem:[#allocation7 + $0x18] sm:$0xff] %v102
    %120 = vst [vmem:[#allocation7 + $0x20] sm:$0xff] %v105
    %121 = vst [vmem:[#allocation7 + $0x28] sm:$0xff] %v108
    %122 = vst [vmem:[#allocation7 + $0x30] sm:$0xff] %v111
    %123 = vst [vmem:[#allocation7 + $0x38] sm:$0xff] %v114
    // Predicated region
    $region22: #{tpu_custom_call.1} parent=1 // pred_check
      _
    $region23: #{tpu_custom_call.1} parent=1 // pred_check_branch
      %125 = sbr.rel (0) target = $region25
    $region24: #{tpu_custom_call.1} parent=1 // pred_region
      %127 = vsyncadd [#allocation4], 0
      %s128 = sshll.u32 [#allocation7], 4
      %s129 = int_to_ptr.vmem [resolvable:$true] %s128
      %s130 = sshll.u32 %s3, 4
      %s131 = int_to_ptr.hbm [resolvable:$true] %s130
      %136 = dma.vmem_to_hbm [thread:$0]  %s129, 1024, %s131, [#allocation4], 128, 128, 8
    $region25: #{tpu_custom_call.1} parent=1 // pred_fallthru
      _
    // Predicated region
    $region26: #{tpu_custom_call.1} parent=1 // pred_check
      _
    $region27: #{tpu_custom_call.1} parent=1 // pred_check_branch
      %138 = sbr.rel (0) target = $region29
    $region28: #{tpu_custom_call.1} parent=1 // pred_region
      %140 = dma.done [#allocation4], 1024
    $region29: #{tpu_custom_call.1} parent=1 // pred_fallthru
      _
    %141 = vsyncpa [#allocation3], 1
    %142 = vsyncpa [#allocation6], 1
    %143 = vsyncpa [#allocation4], 1

</llo_original>
